<compile_context>
chip_gen: v5e
topology: v5e:2x2
jax: 0.10.0
libtpu: 0.0.40
codegen_flags: <defaults>
</compile_context>

<pallas_src>
from typing import NamedTuple

import jax
import jax.numpy as jnp
from jax import lax
from jax.experimental import pallas as pl
from jax.experimental.pallas import tpu as pltpu

EPS = 1e-6  # nn.LayerNorm(size, eps=1e-06) in the module


def _round_up(n, m):
    return ((n + m - 1) // m) * m


def _next_pow2(n):
    p = 1
    while p < n:
        p *= 2
    return p


def _pad_feature(d):
    """Pad a feature dim so it divides 128 (or is a multiple of 128)."""
    if d > 128:
        return _round_up(d, 128)
    return _next_pow2(d)


def _block_diag(w, p):
    """(a, b) -> (p*a, p*b) block-diagonal with p copies of w on the diagonal."""
    a, b = w.shape
    eye = jnp.eye(p, dtype=w.dtype)
    return (eye[:, None, :, None] * w[None, :, None, :]).reshape(p * a, p * b)


class _PreparedParams(NamedTuple):
    a_mat: jax.Array   # (PD, PD) f32 block-diagonal averaging matrix
    w1: jax.Array      # (PD, PF) matmul dtype, gamma folded in
    b1: jax.Array      # (1, PF) f32, beta folded in
    w2: jax.Array      # (PF, PD) matmul dtype
    b2: jax.Array      # (1, PD) f32
    d_model: int
    tokens_per_row: int   # P
    padded_d: int         # Df


def prepare_params(gamma, beta, w1, b1, w2, b2, *, matmul_dtype=None):
    """One-time parameter preparation (block-diag expansion, gamma/beta fold).

    matmul_dtype: dtype fed to the two FF matmuls.  None = native weight dtype.
    Use jnp.bfloat16 for f32 models on v5e (faster MXU passes, looser tolerance).
    """
    D, d_ff = w1.shape
    Df = _pad_feature(D)
    P = 128 // Df if Df <= 128 else 1
    PD = P * Df
    lane_unit = 128 // P
    Ffp = _round_up(d_ff, lane_unit)
    PF = P * Ffp

    if matmul_dtype is None:
        matmul_dtype = w1.dtype
    f32 = jnp.float32

    # Block-diagonal averaging matrix, masked to the true d_model lanes so the
    # LayerNorm statistics ignore zero-padded feature lanes.
    seg = jnp.zeros((Df, Df), f32).at[:D, :D].set(jnp.float32(1.0 / D))
    a_mat = _block_diag(seg, P)                              # (PD, PD)

    # Zero-pad weights/biases to the padded feature dims.
    w1_p = jnp.zeros((Df, Ffp), f32).at[:D, :d_ff].set(w1.astype(f32))
    w2_p = jnp.zeros((Ffp, Df), f32).at[:d_ff, :D].set(w2.astype(f32))
    b1_p = jnp.zeros((Ffp,), f32).at[:d_ff].set(b1.astype(f32))
    b2_p = jnp.zeros((Df,), f32).at[:D].set(b2.astype(f32))
    g_p = jnp.zeros((Df,), f32).at[:D].set(gamma.astype(f32))
    be_p = jnp.zeros((Df,), f32).at[:D].set(beta.astype(f32))

    w1_bd = _block_diag(w1_p, P)                             # (PD, PF)
    w2_bd = _block_diag(w2_p, P)                             # (PF, PD)
    g_t = jnp.tile(g_p, P)                                   # (PD,)
    be_t = jnp.tile(be_p, P)                                 # (PD,)
    b1_t = jnp.tile(b1_p, P)                                 # (PF,)
    b2_t = jnp.tile(b2_p, P)                                 # (PD,)

    # Fold LayerNorm's affine (gamma, beta) into the first FF matmul.
    # Exact: the affine is linear and sits before the ReLU.
    w1_fold = (g_t[:, None] * w1_bd).astype(matmul_dtype)
    b1_fold = (be_t @ w1_bd + b1_t).reshape(1, PF)           # f32

    return _PreparedParams(
        a_mat=a_mat,
        w1=w1_fold,
        b1=b1_fold,
        w2=w2_bd.astype(matmul_dtype),
        b2=b2_t.reshape(1, PD),
        d_model=D,
        tokens_per_row=P,
        padded_d=Df,
    )


def _res_ln_ff_kernel(x_ref, a_ref, w1_ref, b1_ref, w2_ref, b2_ref, o_ref):
    """One tile of (tm, PD) packed token rows; params resident in VMEM."""
    xf = x_ref[...].astype(jnp.float32)

    # --- LayerNorm statistics on the MXU (block-diagonal averaging matrix) ---
    mean_b = jnp.dot(xf, a_ref[...], preferred_element_type=jnp.float32)
    cen = xf - mean_b
    var_b = jnp.dot(cen * cen, a_ref[...], preferred_element_type=jnp.float32)
    xn = cen * lax.rsqrt(var_b + EPS)        # gamma/beta folded into w1/b1

    # --- Positionwise feed-forward (Conv1d k=1 == matmul) ---
    h = jnp.dot(xn.astype(w1_ref.dtype), w1_ref[...],
                preferred_element_type=jnp.float32)
    h = jnp.maximum(h + b1_ref[...], 0.0)    # bias (with beta folded) + ReLU
    out = jnp.dot(h.astype(w2_ref.dtype), w2_ref[...],
                  preferred_element_type=jnp.float32)
    out = out + b2_ref[...]
    # TODO(synk): inner/outer Dropout layers are identity (eval-mode semantics).

    # --- Residual add: re-read x so its f32 copy isn't live across matmuls ---
    o_ref[...] = (x_ref[...].astype(jnp.float32) + out).astype(o_ref.dtype)


def residual_layernorm_ff(x, params: _PreparedParams, *, tm_max=1024):
    """x: (B, S, D); params from prepare_params().  Returns (B, S, D)."""
    B, S, D = x.shape
    assert D == params.d_model, "x feature dim does not match prepared params"
    P, Df = params.tokens_per_row, params.padded_d
    PD = params.a_mat.shape[0]
    PF = params.w1.shape[1]
    M = B * S

    R = pl.cdiv(M, P)                            # packed rows needed
    # Cap tm so the grid has ~8+ steps (v7x megacore + pipeline overlap), but
    # never below one (8,128)-tile; tm_max=1024 is safe on v5e's scoped VMEM
    # (raise to 2048 on v6e for large M).
    tm = max(8, min(tm_max, _round_up(pl.cdiv(R, 8), 8)))
    R_pad = _round_up(R, tm)
    grid = (R_pad // tm,)

    # Layout plumbing only: pad feature lanes, pad rows, pack P tokens per row.
    x2 = x.reshape(M, D)
    if Df != D:
        x2 = jnp.pad(x2, ((0, 0), (0, Df - D)))
    pad_rows = R_pad * P - M
    if pad_rows:
        x2 = jnp.pad(x2, ((0, pad_rows), (0, 0)))
    xp = x2.reshape(R_pad, PD)

    # Explicit VMEM budget: x/out double-buffered + resident params + f32 temps.
    param_bytes = sum(int(a.size) * a.dtype.itemsize
                      for a in (params.a_mat, params.w1, params.b1,
                                params.w2, params.b2))
    vmem_est = (4 * tm * PD * x.dtype.itemsize       # x + out, double-buffered
                + param_bytes
                + 6 * tm * max(PD, PF) * 4           # f32 temporaries headroom
                + (2 << 20))
    vmem_limit = int(min(max(vmem_est, 32 << 20), 64 << 20))

    const = lambda i: (0, 0)
    out = pl.pallas_call(
        _res_ln_ff_kernel,
        out_shape=jax.ShapeDtypeStruct((R_pad, PD), x.dtype),
        grid=grid,
        in_specs=[
            pl.BlockSpec((tm, PD), lambda i: (i, 0)),                         # packed x rows
            pl.BlockSpec((PD, PD), const, pipeline_mode=pl.Buffered(1)),      # averaging matrix
            pl.BlockSpec((PD, PF), const, pipeline_mode=pl.Buffered(1)),      # W1 (gamma folded)
            pl.BlockSpec((1, PF), const),                                     # b1 (beta folded)
            pl.BlockSpec((PF, PD), const, pipeline_mode=pl.Buffered(1)),      # W2
            pl.BlockSpec((1, PD), const),                                     # b2
        ],
        out_specs=pl.BlockSpec((tm, PD), lambda i: (i, 0)),
        compiler_params=pltpu.CompilerParams(
            dimension_semantics=("parallel",),
            vmem_limit_bytes=vmem_limit),
    )(xp, params.a_mat, params.w1, params.b1, params.w2, params.b2)

    out = out.reshape(R_pad * P, Df)[:M, :D]
    return out.reshape(B, S, D)


def _reference(x, gamma, beta, w1, b1, w2, b2):
    xf = x.astype(jnp.float32)
    mean = jnp.mean(xf, axis=-1, keepdims=True)
    var = jnp.mean((xf - mean) ** 2, axis=-1, keepdims=True)
    xn = (xf - mean) * lax.rsqrt(var + EPS) * gamma + beta
    h = jnp.maximum(xn @ w1 + b1, 0.0)
    out = h @ w2 + b2
    return (xf + out).astype(x.dtype)


if __name__ == "__main__":
    key = jax.random.PRNGKey(0)
    B, S, D, d_ff = 2, 8, 32, 64   # size = d_model = 32 (LayerNorm(size))

    kx, kg, kb, kw1, kb1, kw2, kb2 = jax.random.split(key, 7)
    x = jax.random.normal(kx, (B, S, D), dtype=jnp.float32)

    # nn.LayerNorm(size): weight/bias of shape (D,)
    gamma = 1.0 + 0.01 * jax.random.normal(kg, (D,), dtype=jnp.float32)
    beta = 0.01 * jax.random.normal(kb, (D,), dtype=jnp.float32)
    # _PositionwiseFeedForward: Conv1d(D, d_ff, 1) and Conv1d(d_ff, D, 1),
    # already in matmul-ready layout (D, d_ff) / (d_ff, D).
    w1 = 0.1 * jax.random.normal(kw1, (D, d_ff), dtype=jnp.float32)
    b1 = 0.1 * jax.random.normal(kb1, (d_ff,), dtype=jnp.float32)
    w2 = 0.1 * jax.random.normal(kw2, (d_ff, D), dtype=jnp.float32)
    b2 = 0.1 * jax.random.normal(kb2, (D,), dtype=jnp.float32)

    # One-time parameter preparation (block-diag expansion, gamma/beta fold).
    params = prepare_params(gamma, beta, w1, b1, w2, b2)

    y = residual_layernorm_ff(x, params)
    y = jax.block_until_ready(y)

    y_ref = _reference(x, gamma, beta, w1, b1, w2, b2)
    assert y.shape == x.shape
    assert jnp.allclose(y, y_ref, atol=2e-4, rtol=2e-4), "mismatch vs reference"

    print("KERNEL_OK")
</pallas_src>

<mosaic_0001>
module attributes {stable_mosaic.version = 11 : i64} {
  func.func @_res_ln_ff_kernel(%arg0: i32, %arg1: memref<8x128xf32, #tpu.memory_space<vmem>>, %arg2: memref<128x128xf32, #tpu.memory_space<vmem>>, %arg3: memref<128x256xf32, #tpu.memory_space<vmem>>, %arg4: memref<1x256xf32, #tpu.memory_space<vmem>>, %arg5: memref<256x128xf32, #tpu.memory_space<vmem>>, %arg6: memref<1x128xf32, #tpu.memory_space<vmem>>, %arg7: memref<8x128xf32, #tpu.memory_space<vmem>>) attributes {dimension_semantics = [#tpu.dimension_semantics<parallel>], iteration_bounds = array<i64: 1>, scalar_prefetch = 0 : i64, scratch_operands = 0 : i64, tpu.core_type = #tpu.core_type<tc>, window_params = [{transform_indices = @transform_0, window_bounds = array<i64: 8, 128>}, {pipeline_mode = #tpu.pipeline_mode<synchronous>, transform_indices = @transform_1, window_bounds = array<i64: 128, 128>}, {pipeline_mode = #tpu.pipeline_mode<synchronous>, transform_indices = @transform_2, window_bounds = array<i64: 128, 256>}, {pipeline_mode = #tpu.pipeline_mode<synchronous>, transform_indices = @transform_3, window_bounds = array<i64: 1, 256>}, {pipeline_mode = #tpu.pipeline_mode<synchronous>, transform_indices = @transform_4, window_bounds = array<i64: 256, 128>}, {pipeline_mode = #tpu.pipeline_mode<synchronous>, transform_indices = @transform_5, window_bounds = array<i64: 1, 128>}, {transform_indices = @transform_6, window_bounds = array<i64: 8, 128>}]} {
    %c0 = arith.constant 0 : index
    %c0_0 = arith.constant 0 : index
    %0 = vector.load %arg1[%c0, %c0_0] : memref<8x128xf32, #tpu.memory_space<vmem>>, vector<8x128xf32>
    %c0_1 = arith.constant 0 : index
    %c0_2 = arith.constant 0 : index
    %1 = vector.load %arg2[%c0_1, %c0_2] : memref<128x128xf32, #tpu.memory_space<vmem>>, vector<128x128xf32>
    %cst = arith.constant dense<0.000000e+00> : vector<8x128xf32>
    %2 = tpu.matmul %0, %1, %cst {dimension_numbers = #tpu.dot_dimension_numbers<[1], [0], [0], [1], [0, 0, 1, 1], [], []>} : vector<8x128xf32>, vector<128x128xf32>, vector<8x128xf32> -> vector<8x128xf32>
    %3 = arith.subf %0, %2 : vector<8x128xf32>
    %4 = arith.mulf %3, %3 : vector<8x128xf32>
    %c0_3 = arith.constant 0 : index
    %c0_4 = arith.constant 0 : index
    %5 = vector.load %arg2[%c0_3, %c0_4] : memref<128x128xf32, #tpu.memory_space<vmem>>, vector<128x128xf32>
    %cst_5 = arith.constant dense<0.000000e+00> : vector<8x128xf32>
    %6 = tpu.matmul %4, %5, %cst_5 {dimension_numbers = #tpu.dot_dimension_numbers<[1], [0], [0], [1], [0, 0, 1, 1], [], []>} : vector<8x128xf32>, vector<128x128xf32>, vector<8x128xf32> -> vector<8x128xf32>
    %cst_6 = arith.constant 9.99999997E-7 : f32
    %7 = vector.broadcast %cst_6 : f32 to vector<8x128xf32>
    %8 = arith.addf %6, %7 : vector<8x128xf32>
    %9 = math.rsqrt %8 : vector<8x128xf32>
    %10 = arith.mulf %3, %9 : vector<8x128xf32>
    %c0_7 = arith.constant 0 : index
    %c0_8 = arith.constant 0 : index
    %11 = vector.load %arg3[%c0_7, %c0_8] : memref<128x256xf32, #tpu.memory_space<vmem>>, vector<128x256xf32>
    %cst_9 = arith.constant dense<0.000000e+00> : vector<8x256xf32>
    %12 = tpu.matmul %10, %11, %cst_9 {dimension_numbers = #tpu.dot_dimension_numbers<[1], [0], [0], [1], [0, 0, 1, 1], [], []>} : vector<8x128xf32>, vector<128x256xf32>, vector<8x256xf32> -> vector<8x256xf32>
    %c0_10 = arith.constant 0 : index
    %c0_11 = arith.constant 0 : index
    %13 = vector.load %arg4[%c0_10, %c0_11] : memref<1x256xf32, #tpu.memory_space<vmem>>, vector<1x256xf32>
    %14 = vector.broadcast %13 : vector<1x256xf32> to vector<8x256xf32>
    %15 = arith.addf %12, %14 : vector<8x256xf32>
    %cst_12 = arith.constant 0.000000e+00 : f32
    %16 = vector.broadcast %cst_12 : f32 to vector<8x256xf32>
    %17 = arith.maximumf %15, %16 : vector<8x256xf32>
    %c0_13 = arith.constant 0 : index
    %c0_14 = arith.constant 0 : index
    %18 = vector.load %arg5[%c0_13, %c0_14] : memref<256x128xf32, #tpu.memory_space<vmem>>, vector<256x128xf32>
    %cst_15 = arith.constant dense<0.000000e+00> : vector<8x128xf32>
    %19 = tpu.matmul %17, %18, %cst_15 {dimension_numbers = #tpu.dot_dimension_numbers<[1], [0], [0], [1], [0, 0, 1, 1], [], []>} : vector<8x256xf32>, vector<256x128xf32>, vector<8x128xf32> -> vector<8x128xf32>
    %c0_16 = arith.constant 0 : index
    %c0_17 = arith.constant 0 : index
    %20 = vector.load %arg6[%c0_16, %c0_17] : memref<1x128xf32, #tpu.memory_space<vmem>>, vector<1x128xf32>
    %21 = vector.broadcast %20 : vector<1x128xf32> to vector<8x128xf32>
    %22 = arith.addf %19, %21 : vector<8x128xf32>
    %c0_18 = arith.constant 0 : index
    %c0_19 = arith.constant 0 : index
    %23 = vector.load %arg1[%c0_18, %c0_19] : memref<8x128xf32, #tpu.memory_space<vmem>>, vector<8x128xf32>
    %24 = arith.addf %23, %22 : vector<8x128xf32>
    %c0_20 = arith.constant 0 : index
    %c0_21 = arith.constant 0 : index
    %25 = vector.load %arg7[%c0_20, %c0_21] : memref<8x128xf32, #tpu.memory_space<vmem>>, vector<8x128xf32>
    tpu.vector_store %arg7[%c0_20, %c0_21], %24 {strides = array<i32>} : memref<8x128xf32, #tpu.memory_space<vmem>>, vector<8x128xf32>,
    return
  }
  func.func @transform_0(%arg0: i32) -> (i32, i32) {
    %c0_i32 = arith.constant 0 : i32
    %c0_i32_0 = arith.constant 0 : i32
    return %arg0, %c0_i32 : i32, i32
  }
  func.func @transform_1(%arg0: i32) -> (i32, i32) {
    %c0_i32 = arith.constant 0 : i32
    %c0_i32_0 = arith.constant 0 : i32
    %c0_i32_1 = arith.constant 0 : i32
    return %c0_i32, %c0_i32_0 : i32, i32
  }
  func.func @transform_2(%arg0: i32) -> (i32, i32) {
    %c0_i32 = arith.constant 0 : i32
    %c0_i32_0 = arith.constant 0 : i32
    %c0_i32_1 = arith.constant 0 : i32
    return %c0_i32, %c0_i32_0 : i32, i32
  }
  func.func @transform_3(%arg0: i32) -> (i32, i32) {
    %c0_i32 = arith.constant 0 : i32
    %c0_i32_0 = arith.constant 0 : i32
    %c0_i32_1 = arith.constant 0 : i32
    return %c0_i32, %c0_i32_0 : i32, i32
  }
  func.func @transform_4(%arg0: i32) -> (i32, i32) {
    %c0_i32 = arith.constant 0 : i32
    %c0_i32_0 = arith.constant 0 : i32
    %c0_i32_1 = arith.constant 0 : i32
    return %c0_i32, %c0_i32_0 : i32, i32
  }
  func.func @transform_5(%arg0: i32) -> (i32, i32) {
    %c0_i32 = arith.constant 0 : i32
    %c0_i32_0 = arith.constant 0 : i32
    %c0_i32_1 = arith.constant 0 : i32
    return %c0_i32, %c0_i32_0 : i32, i32
  }
  func.func @transform_6(%arg0: i32) -> (i32, i32) {
    %c0_i32 = arith.constant 0 : i32
    %c0_i32_0 = arith.constant 0 : i32
    return %arg0, %c0_i32 : i32, i32
  }
}

</mosaic_0001>

<llo_original>
// kernel: tpu_custom_call.1
$region0: #{tpu_custom_call.1}
  #allocation0 [shape = 'u32[]', space=smem, size = 0x4, offset = 0x4, fixed_abs, tag = 'smem constant byte address 0x4 - core index']
  #allocation1 [shape = 'u32[72,128]{1,0:T(1,128)}', space=vmem, size = 0x9000, scoped, tag = 'internal scratch']
  %s0 = inlined_call_operand.hbm [shape: f32[8,128], index: 0, kind: input, shape index: {}]
  %s1 = inlined_call_operand.hbm [shape: f32[128,128], index: 1, kind: input, shape index: {}]
  %s2 = inlined_call_operand.hbm [shape: f32[128,256], index: 2, kind: input, shape index: {}]
  %s3 = inlined_call_operand.vmem [shape: f32[1,256], index: 3, kind: input, shape index: {}]
  %s4 = inlined_call_operand.hbm [shape: f32[256,128], index: 4, kind: input, shape index: {}]
  %s5 = inlined_call_operand.vmem [shape: f32[1,128], index: 5, kind: input, shape index: {}]
  %s6 = inlined_call_operand.hbm [shape: f32[8,128], index: 6, kind: output, shape index: {}]
  %s7 = sld [smem:[#allocation0]]
  $region50: #{tpu_custom_call.1} parent=0
    _
  %s9 = ssub.s32 1, %s7
  %s10 = scalar_select 0, %s9, %s7
  $region1: #{tpu_custom_call.1} parent=0
    #allocation2 [shape = 'u8[4096]{0}', space=vmem, size = 0x1000, scoped, tag = 'input window, operand 0, single buffered']
    #allocation3 [shape = 's32[1]{0}', space=sflag, size = 0x4, scoped, tag = 'scoped memory for tpu_custom_call.1']
    #allocation4 [shape = 's32[1]{0}', space=sflag, size = 0x4, scoped, tag = 'scoped memory for tpu_custom_call.1']
    #allocation5 [shape = 'u8[65536]{0}', space=vmem, size = 0x10000, scoped, tag = 'input window, operand 1, single buffered']
    #allocation6 [shape = 's32[1]{0}', space=sflag, size = 0x4, scoped, tag = 'scoped memory for tpu_custom_call.1']
    #allocation7 [shape = 'u8[131072]{0}', space=vmem, size = 0x20000, scoped, tag = 'input window, operand 2, single buffered']
    #allocation8 [shape = 'u8[131072]{0}', space=vmem, size = 0x20000, scoped, tag = 'input window, operand 4, single buffered']
    #allocation9 [shape = 's32[1]{0}', space=sflag, size = 0x4, scoped, tag = 'scoped memory for tpu_custom_call.1']
    #allocation10 [shape = 'u8[4096]{0}', space=vmem, size = 0x1000, scoped, tag = 'output window, operand 0, single buffered']
    %11 = vsyncpa [#allocation3], 0
    %12 = vsyncpa [#allocation6], 0
    %13 = vsyncpa [#allocation9], 0
    %14 = vsyncpa [#allocation4], 0
    // Predicated region
    $region2: #{tpu_custom_call.1} parent=1 // pred_check
      _
    $region3: #{tpu_custom_call.1} parent=1 // pred_check_branch
      %16 = sbr.rel (0) target = $region5
    $region4: #{tpu_custom_call.1} parent=1 // pred_region
      %18 = vsyncadd [#allocation3], 0
      %s20 = sshll.u32 %s0, 4
      %s21 = int_to_ptr.hbm [resolvable:$true] %s20
      %s22 = sshll.u32 [#allocation2], 4
      %s23 = int_to_ptr.vmem [resolvable:$true] %s22
      %25 = dma.hbm_to_vmem [thread:$0]  %s21, 128, %s23, [#allocation3]
    $region5: #{tpu_custom_call.1} parent=1 // pred_fallthru
      _
    // Predicated region
    $region6: #{tpu_custom_call.1} parent=1 // pred_check
      _
    $region7: #{tpu_custom_call.1} parent=1 // pred_check_branch
      %27 = sbr.rel (0) target = $region9
    $region8: #{tpu_custom_call.1} parent=1 // pred_region
      %29 = vsyncadd [#allocation6], 0
      %s30 = sshll.u32 %s1, 4
      %s31 = int_to_ptr.hbm [resolvable:$true] %s30
      %s32 = sshll.u32 [#allocation5], 4
      %s33 = int_to_ptr.vmem [resolvable:$true] %s32
      %38 = dma.hbm_to_vmem [thread:$0]  %s31, 2048, %s33, [#allocation6], 128, 128, 8
    $region9: #{tpu_custom_call.1} parent=1 // pred_fallthru
      _
    // Predicated region
    $region10: #{tpu_custom_call.1} parent=1 // pred_check
      _
    $region11: #{tpu_custom_call.1} parent=1 // pred_check_branch
      %40 = sbr.rel (0) target = $region13
    $region12: #{tpu_custom_call.1} parent=1 // pred_region
      %42 = vsyncadd [#allocation6], 0
      %s43 = sshll.u32 %s2, 4
      %s44 = int_to_ptr.hbm [resolvable:$true] %s43
      %s45 = sshll.u32 [#allocation7], 4
      %s46 = int_to_ptr.vmem [resolvable:$true] %s45
      %51 = dma.hbm_to_vmem [thread:$0]  %s44, 4096, %s46, [#allocation6], 256, 256, 16
    $region13: #{tpu_custom_call.1} parent=1 // pred_fallthru
      _
    // Predicated region
    $region14: #{tpu_custom_call.1} parent=1 // pred_check
      _
    $region15: #{tpu_custom_call.1} parent=1 // pred_check_branch
      %53 = sbr.rel (0) target = $region17
    $region16: #{tpu_custom_call.1} parent=1 // pred_region
      _
    $region17: #{tpu_custom_call.1} parent=1 // pred_fallthru
      _
    // Predicated region
    $region18: #{tpu_custom_call.1} parent=1 // pred_check
      _
    $region19: #{tpu_custom_call.1} parent=1 // pred_check_branch
      %55 = sbr.rel (0) target = $region21
    $region20: #{tpu_custom_call.1} parent=1 // pred_region
      %57 = vsyncadd [#allocation9], 0
      %s58 = sshll.u32 %s4, 4
      %s59 = int_to_ptr.hbm [resolvable:$true] %s58
      %s60 = sshll.u32 [#allocation8], 4
      %s61 = int_to_ptr.vmem [resolvable:$true] %s60
      %66 = dma.hbm_to_vmem [thread:$0]  %s59, 4096, %s61, [#allocation9], 128, 128, 8
    $region21: #{tpu_custom_call.1} parent=1 // pred_fallthru
      _
    // Predicated region
    $region22: #{tpu_custom_call.1} parent=1 // pred_check
      _
    $region23: #{tpu_custom_call.1} parent=1 // pred_check_branch
      %68 = sbr.rel (0) target = $region25
    $region24: #{tpu_custom_call.1} parent=1 // pred_region
      _
    $region25: #{tpu_custom_call.1} parent=1 // pred_fallthru
      _
    // Predicated region
    $region26: #{tpu_custom_call.1} parent=1 // pred_check
      _
    $region27: #{tpu_custom_call.1} parent=1 // pred_check_branch
      %70 = sbr.rel (0) target = $region29
    $region28: #{tpu_custom_call.1} parent=1 // pred_region
      %72 = dma.done [#allocation3], 128
    $region29: #{tpu_custom_call.1} parent=1 // pred_fallthru
      _
    // Predicated region
    $region30: #{tpu_custom_call.1} parent=1 // pred_check
      _
    $region31: #{tpu_custom_call.1} parent=1 // pred_check_branch
      %74 = sbr.rel (0) target = $region33
    $region32: #{tpu_custom_call.1} parent=1 // pred_region
      %76 = dma.done [#allocation6], 2048
    $region33: #{tpu_custom_call.1} parent=1 // pred_fallthru
      _
    // Predicated region
    $region34: #{tpu_custom_call.1} parent=1 // pred_check
      _
    $region35: #{tpu_custom_call.1} parent=1 // pred_check_branch
      %78 = sbr.rel (0) target = $region37
    $region36: #{tpu_custom_call.1} parent=1 // pred_region
      %80 = dma.done [#allocation6], 4096
    $region37: #{tpu_custom_call.1} parent=1 // pred_fallthru
      _
    // Predicated region
    $region38: #{tpu_custom_call.1} parent=1 // pred_check
      _
    $region39: #{tpu_custom_call.1} parent=1 // pred_check_branch
      %82 = sbr.rel (0) target = $region41
    $region40: #{tpu_custom_call.1} parent=1 // pred_region
      %84 = dma.done [#allocation9], 4096
    $region41: #{tpu_custom_call.1} parent=1 // pred_fallthru
      _
    %v85 = vld [vmem:[#allocation2] sm:$0xff]
    %v86 = vld [vmem:[#allocation5] sm:$0xff]
    %v87 = vld [vmem:[#allocation5 + $0x8] sm:$0xff]
    %v88 = vld [vmem:[#allocation5 + $0x10] sm:$0xff]
    %v89 = vld [vmem:[#allocation5 + $0x18] sm:$0xff]
    %v90 = vld [vmem:[#allocation5 + $0x20] sm:$0xff]
    %v91 = vld [vmem:[#allocation5 + $0x28] sm:$0xff]
    %v92 = vld [vmem:[#allocation5 + $0x30] sm:$0xff]
    %v93 = vld [vmem:[#allocation5 + $0x38] sm:$0xff]
    %v94 = vld [vmem:[#allocation5 + $0x40] sm:$0xff]
    %v95 = vld [vmem:[#allocation5 + $0x48] sm:$0xff]
    %v96 = vld [vmem:[#allocation5 + $0x50] sm:$0xff]
    %v97 = vld [vmem:[#allocation5 + $0x58] sm:$0xff]
    %v98 = vld [vmem:[#allocation5 + $0x60] sm:$0xff]
    %v99 = vld [vmem:[#allocation5 + $0x68] sm:$0xff]
    %v100 = vld [vmem:[#allocation5 + $0x70] sm:$0xff]
    %v101 = vld [vmem:[#allocation5 + $0x78] sm:$0xff]
    %102 = vmatpush.msra.mxu0 %v101
    %103 = vmatpush.msra.mxu0 %v100
    %104 = vmatpush.msra.mxu0 %v99
    %105 = vmatpush.msra.mxu0 %v98
    %106 = vmatpush.msra.mxu0 %v97
    %107 = vmatpush.msra.mxu0 %v96
    %108 = vmatpush.msra.mxu0 %v95
    %109 = vmatpush.msra.mxu0 %v94
    %110 = vmatpush.msra.mxu0 %v93
    %111 = vmatpush.msra.mxu0 %v92
    %112 = vmatpush.msra.mxu0 %v91
    %113 = vmatpush.msra.mxu0 %v90
    %114 = vmatpush.msra.mxu0 %v89
    %115 = vmatpush.msra.mxu0 %v88
    %116 = vmatpush.msra.mxu0 %v87
    %117 = vmatpush.msra.mxu0 %v86
    %118 = vmatmul.f32.gmra.mxu0 %v85
    %v119 = vpop.f32.mrf.mxu0
    %v120 = vadd.f32 0.0, %v119
    %121 = vdwg.mxu0
    %v122 = vsub.f32 %v85, %v120
    %v123 = vmul.f32 %v122, %v122
    %124 = vmatpush.msra.mxu0 %v101
    %125 = vmatpush.msra.mxu0 %v100
    %126 = vmatpush.msra.mxu0 %v99
    %127 = vmatpush.msra.mxu0 %v98
    %128 = vmatpush.msra.mxu0 %v97
    %129 = vmatpush.msra.mxu0 %v96
    %130 = vmatpush.msra.mxu0 %v95
    %131 = vmatpush.msra.mxu0 %v94
    %132 = vmatpush.msra.mxu0 %v93
    %133 = vmatpush.msra.mxu0 %v92
    %134 = vmatpush.msra.mxu0 %v91
    %135 = vmatpush.msra.mxu0 %v90
    %136 = vmatpush.msra.mxu0 %v89
    %137 = vmatpush.msra.mxu0 %v88
    %138 = vmatpush.msra.mxu0 %v87
    %139 = vmatpush.msra.mxu0 %v86
    %140 = vmatmul.f32.gmra.mxu0 %v123
    %v141 = vpop.f32.mrf.mxu0
    %v142 = vadd.f32 1e-06, %v141
    %143 = vdwg.mxu0
    %v144 = vrsqrt.pop %v142
    %v145 = vmul.f32 %v144, %v142
    %v146 = vmul.f32 %v145, %v144
    %v147 = vmul.f32 0.5, %v146
    %v148 = vsub.f32 1.5, %v147
    %v149 = vmul.f32 %v144, %v148
    %vm150 = vweird.f32 %v142
    %vm151 = vweird.f32 %v144
    %vm152 = vmor %vm150, %vm151
    %v153 = vsel %vm152, %v144, %v149
    %v154 = vmul.f32 %v122, %v153
    %v155 = vld [vmem:[#allocation7] sm:$0xff]
    %v156 = vld [vmem:[#allocation7 + $0x8] sm:$0xff]
    %v157 = vld [vmem:[#allocation7 + $0x10] sm:$0xff]
    %v158 = vld [vmem:[#allocation7 + $0x18] sm:$0xff]
    %v159 = vld [vmem:[#allocation7 + $0x20] sm:$0xff]
    %v160 = vld [vmem:[#allocation7 + $0x28] sm:$0xff]
    %v161 = vld [vmem:[#allocation7 + $0x30] sm:$0xff]
    %v162 = vld [vmem:[#allocation7 + $0x38] sm:$0xff]
    %v163 = vld [vmem:[#allocation7 + $0x40] sm:$0xff]
    %v164 = vld [vmem:[#allocation7 + $0x48] sm:$0xff]
    %v165 = vld [vmem:[#allocation7 + $0x50] sm:$0xff]
    %v166 = vld [vmem:[#allocation7 + $0x58] sm:$0xff]
    %v167 = vld [vmem:[#allocation7 + $0x60] sm:$0xff]
    %v168 = vld [vmem:[#allocation7 + $0x68] sm:$0xff]
    %v169 = vld [vmem:[#allocation7 + $0x70] sm:$0xff]
    %v170 = vld [vmem:[#allocation7 + $0x78] sm:$0xff]
    %v171 = vld [vmem:[#allocation7 + $0x80] sm:$0xff]
    %v172 = vld [vmem:[#allocation7 + $0x88] sm:$0xff]
    %v173 = vld [vmem:[#allocation7 + $0x90] sm:$0xff]
    %v174 = vld [vmem:[#allocation7 + $0x98] sm:$0xff]
    %v175 = vld [vmem:[#allocation7 + $0xa0] sm:$0xff]
    %v176 = vld [vmem:[#allocation7 + $0xa8] sm:$0xff]
    %v177 = vld [vmem:[#allocation7 + $0xb0] sm:$0xff]
    %v178 = vld [vmem:[#allocation7 + $0xb8] sm:$0xff]
    %v179 = vld [vmem:[#allocation7 + $0xc0] sm:$0xff]
    %v180 = vld [vmem:[#allocation7 + $0xc8] sm:$0xff]
    %v181 = vld [vmem:[#allocation7 + $0xd0] sm:$0xff]
    %v182 = vld [vmem:[#allocation7 + $0xd8] sm:$0xff]
    %v183 = vld [vmem:[#allocation7 + $0xe0] sm:$0xff]
    %v184 = vld [vmem:[#allocation7 + $0xe8] sm:$0xff]
    %v185 = vld [vmem:[#allocation7 + $0xf0] sm:$0xff]
    %v186 = vld [vmem:[#allocation7 + $0xf8] sm:$0xff]
    %v187 = vld [vmem:[%s3] sm:$0x3]
    %v189 = vperm.slane %v187, 0
    %v190 = vperm.slane %v187, 1
    %193 = vmatpush.msra.mxu0 %v185
    %194 = vmatpush.msra.mxu0 %v183
    %195 = vmatpush.msra.mxu0 %v181
    %196 = vmatpush.msra.mxu0 %v179
    %197 = vmatpush.msra.mxu0 %v177
    %198 = vmatpush.msra.mxu0 %v175
    %199 = vmatpush.msra.mxu0 %v173
    %200 = vmatpush.msra.mxu0 %v171
    %201 = vmatpush.msra.mxu0 %v169
    %202 = vmatpush.msra.mxu0 %v167
    %203 = vmatpush.msra.mxu0 %v165
    %204 = vmatpush.msra.mxu0 %v163
    %205 = vmatpush.msra.mxu0 %v161
    %206 = vmatpush.msra.mxu0 %v159
    %207 = vmatpush.msra.mxu0 %v157
    %208 = vmatpush.msra.mxu0 %v155
    %209 = vmatmul.f32.gmra.mxu0 %v154
    %v210 = vpop.f32.mrf.mxu0
    %v211 = vadd.f32 %v189, %v210
    %212 = vdwg.mxu0
    %213 = vmatpush.msra.mxu0 %v186
    %214 = vmatpush.msra.mxu0 %v184
    %215 = vmatpush.msra.mxu0 %v182
    %216 = vmatpush.msra.mxu0 %v180
    %217 = vmatpush.msra.mxu0 %v178
    %218 = vmatpush.msra.mxu0 %v176
    %219 = vmatpush.msra.mxu0 %v174
    %220 = vmatpush.msra.mxu0 %v172
    %221 = vmatpush.msra.mxu0 %v170
    %222 = vmatpush.msra.mxu0 %v168
    %223 = vmatpush.msra.mxu0 %v166
    %224 = vmatpush.msra.mxu0 %v164
    %225 = vmatpush.msra.mxu0 %v162
    %226 = vmatpush.msra.mxu0 %v160
    %227 = vmatpush.msra.mxu0 %v158
    %228 = vmatpush.msra.mxu0 %v156
    %229 = vmatmul.f32.gmra.mxu0 %v154
    %v230 = vpop.f32.mrf.mxu0
    %v231 = vadd.f32 %v190, %v230
    %232 = vdwg.mxu0
    %v233 = vmax.f32 %v211, 0.0
    %v234 = vmax.f32 %v231, 0.0
    %v235 = vld [vmem:[#allocation8] sm:$0xff]
    %v236 = vld [vmem:[#allocation8 + $0x8] sm:$0xff]
    %v237 = vld [vmem:[#allocation8 + $0x10] sm:$0xff]
    %v238 = vld [vmem:[#allocation8 + $0x18] sm:$0xff]
    %v239 = vld [vmem:[#allocation8 + $0x20] sm:$0xff]
    %v240 = vld [vmem:[#allocation8 + $0x28] sm:$0xff]
    %v241 = vld [vmem:[#allocation8 + $0x30] sm:$0xff]
    %v242 = vld [vmem:[#allocation8 + $0x38] sm:$0xff]
    %v243 = vld [vmem:[#allocation8 + $0x40] sm:$0xff]
    %v244 = vld [vmem:[#allocation8 + $0x48] sm:$0xff]
    %v245 = vld [vmem:[#allocation8 + $0x50] sm:$0xff]
    %v246 = vld [vmem:[#allocation8 + $0x58] sm:$0xff]
    %v247 = vld [vmem:[#allocation8 + $0x60] sm:$0xff]
    %v248 = vld [vmem:[#allocation8 + $0x68] sm:$0xff]
    %v249 = vld [vmem:[#allocation8 + $0x70] sm:$0xff]
    %v250 = vld [vmem:[#allocation8 + $0x78] sm:$0xff]
    %v251 = vld [vmem:[#allocation8 + $0x80] sm:$0xff]
    %v252 = vld [vmem:[#allocation8 + $0x88] sm:$0xff]
    %v253 = vld [vmem:[#allocation8 + $0x90] sm:$0xff]
    %v254 = vld [vmem:[#allocation8 + $0x98] sm:$0xff]
    %v255 = vld [vmem:[#allocation8 + $0xa0] sm:$0xff]
    %v256 = vld [vmem:[#allocation8 + $0xa8] sm:$0xff]
    %v257 = vld [vmem:[#allocation8 + $0xb0] sm:$0xff]
    %v258 = vld [vmem:[#allocation8 + $0xb8] sm:$0xff]
    %v259 = vld [vmem:[#allocation8 + $0xc0] sm:$0xff]
    %v260 = vld [vmem:[#allocation8 + $0xc8] sm:$0xff]
    %v261 = vld [vmem:[#allocation8 + $0xd0] sm:$0xff]
    %v262 = vld [vmem:[#allocation8 + $0xd8] sm:$0xff]
    %v263 = vld [vmem:[#allocation8 + $0xe0] sm:$0xff]
    %v264 = vld [vmem:[#allocation8 + $0xe8] sm:$0xff]
    %v265 = vld [vmem:[#allocation8 + $0xf0] sm:$0xff]
    %v266 = vld [vmem:[#allocation8 + $0xf8] sm:$0xff]
    %v267 = vld [vmem:[%s5] sm:$0x1]
    %v269 = vperm.slane %v267, 0
    %271 = vmatpush.msra.mxu0 %v250
    %272 = vmatpush.msra.mxu0 %v249
    %273 = vmatpush.msra.mxu0 %v248
    %274 = vmatpush.msra.mxu0 %v247
    %275 = vmatpush.msra.mxu0 %v246
    %276 = vmatpush.msra.mxu0 %v245
    %277 = vmatpush.msra.mxu0 %v244
    %278 = vmatpush.msra.mxu0 %v243
    %279 = vmatpush.msra.mxu0 %v242
    %280 = vmatpush.msra.mxu0 %v241
    %281 = vmatpush.msra.mxu0 %v240
    %282 = vmatpush.msra.mxu0 %v239
    %283 = vmatpush.msra.mxu0 %v238
    %284 = vmatpush.msra.mxu0 %v237
    %285 = vmatpush.msra.mxu0 %v236
    %286 = vmatpush.msra.mxu0 %v235
    %287 = vmatmul.f32.gmra.mxu0 %v233
    %v288 = vpop.f32.mrf.mxu0
    %v289 = vadd.f32 %v269, %v288
    %290 = vdwg.mxu0
    %291 = vmatpush.msra.mxu0 %v266
    %292 = vmatpush.msra.mxu0 %v265
    %293 = vmatpush.msra.mxu0 %v264
    %294 = vmatpush.msra.mxu0 %v263
    %295 = vmatpush.msra.mxu0 %v262
    %296 = vmatpush.msra.mxu0 %v261
    %297 = vmatpush.msra.mxu0 %v260
    %298 = vmatpush.msra.mxu0 %v259
    %299 = vmatpush.msra.mxu0 %v258
    %300 = vmatpush.msra.mxu0 %v257
    %301 = vmatpush.msra.mxu0 %v256
    %302 = vmatpush.msra.mxu0 %v255
    %303 = vmatpush.msra.mxu0 %v254
    %304 = vmatpush.msra.mxu0 %v253
    %305 = vmatpush.msra.mxu0 %v252
    %306 = vmatpush.msra.mxu0 %v251
    %307 = vmatmul.f32.gmra.mxu0 %v234
    %v308 = vpop.f32.mrf.mxu0
    %v309 = vadd.f32 %v289, %v308
    %310 = vdwg.mxu0
    %v311 = vadd.f32 %v85, %v309
    %312 = vst [vmem:[#allocation10] sm:$0xff] %v311
    // Predicated region
    $region42: #{tpu_custom_call.1} parent=1 // pred_check
      _
    $region43: #{tpu_custom_call.1} parent=1 // pred_check_branch
      %314 = sbr.rel (0) target = $region45
    $region44: #{tpu_custom_call.1} parent=1 // pred_region
      %316 = vsyncadd [#allocation4], 0
      %s318 = sshll.u32 [#allocation10], 4
      %s319 = int_to_ptr.vmem [resolvable:$true] %s318
      %s320 = sshll.u32 %s6, 4
      %s321 = int_to_ptr.hbm [resolvable:$true] %s320
      %323 = dma.vmem_to_hbm [thread:$0]  %s319, 128, %s321, [#allocation4]
    $region45: #{tpu_custom_call.1} parent=1 // pred_fallthru
      _
    // Predicated region
    $region46: #{tpu_custom_call.1} parent=1 // pred_check
      _
    $region47: #{tpu_custom_call.1} parent=1 // pred_check_branch
      %325 = sbr.rel (0) target = $region49
    $region48: #{tpu_custom_call.1} parent=1 // pred_region
      %327 = dma.done [#allocation4], 128
    $region49: #{tpu_custom_call.1} parent=1 // pred_fallthru
      _
    %328 = vsyncpa [#allocation3], 1
    %329 = vsyncpa [#allocation6], 1
    %330 = vsyncpa [#allocation9], 1
    %331 = vsyncpa [#allocation4], 1

</llo_original>
